<compile_context>
chip_gen: v7x
topology: tpu7x:2x2x1
jax: 0.10.0
libtpu: 0.0.40
codegen_flags: <defaults>
</compile_context>

<pallas_src>
import jax
import jax.numpy as jnp
import numpy as np
from jax import lax
from jax.experimental import pallas as pl
from jax.experimental.pallas import tpu as pltpu


_PALLAS_MIN_ELEMENTS = 4096       # below this, the pure-JAX gather is faster
_TARGET_TILE_BYTES = 2 << 20      # ~2 MiB per buffer (fits all generations)
_MAX_TILE_BYTES = 16 << 20        # beyond this, bail out to the JAX fallback

_COMPILER_PARAMS = pltpu.CompilerParams(
    dimension_semantics=("parallel", "parallel"))


def _copy_kernel(perm_ref, x_ref, o_ref):
    # The permutation is consumed by the index_maps (scalar prefetch);
    # the body is a plain streaming tile copy.
    del perm_ref
    o_ref[...] = x_ref[...]


def _pick_batch_tile(batch, piece_len, itemsize):
    """Rows per tile: a multiple of 8 dividing `batch`, or `batch` itself."""
    cands = {batch}
    cands.update(d for d in range(8, batch + 1, 8) if batch % d == 0)
    bytes_of = lambda tb: tb * piece_len * itemsize
    fitting = [tb for tb in cands if bytes_of(tb) <= _TARGET_TILE_BYTES]
    if fitting:
        return max(fitting)
    best = min(cands, key=bytes_of)
    return best if bytes_of(best) <= _MAX_TILE_BYTES else None


def _puzzle_pallas_lanes(main2, perm, pieces, piece_len, tb):
    """piece_len % 128 == 0: gather pieces along the lane axis of the 2-D slab."""
    batch, l_main = main2.shape
    grid_spec = pltpu.PrefetchScalarGridSpec(
        num_scalar_prefetch=1,
        grid=(pieces, batch // tb),
        in_specs=[pl.BlockSpec((tb, piece_len),
                               lambda p, b, perm_ref: (b, perm_ref[p]))],
        out_specs=pl.BlockSpec((tb, piece_len),
                               lambda p, b, perm_ref: (b, p)),
    )
    return pl.pallas_call(
        _copy_kernel,
        out_shape=jax.ShapeDtypeStruct((batch, l_main), main2.dtype),
        grid_spec=grid_spec,
        compiler_params=_COMPILER_PARAMS,
    )(perm, main2)


def _puzzle_pallas_piece_major(main_pm, perm, pieces, piece_len, tb):
    """General piece_len: piece-major (pieces, B, piece_len) layout."""
    _, batch, _ = main_pm.shape
    grid_spec = pltpu.PrefetchScalarGridSpec(
        num_scalar_prefetch=1,
        grid=(pieces, batch // tb),
        in_specs=[pl.BlockSpec((1, tb, piece_len),
                               lambda p, b, perm_ref: (perm_ref[p], b, 0))],
        out_specs=pl.BlockSpec((1, tb, piece_len),
                               lambda p, b, perm_ref: (p, b, 0)),
    )
    return pl.pallas_call(
        _copy_kernel,
        out_shape=jax.ShapeDtypeStruct((pieces, batch, piece_len), main_pm.dtype),
        grid_spec=grid_spec,
        compiler_params=_COMPILER_PARAMS,
    )(perm, main_pm)


def _puzzle_apply(x, perm, pieces):
    """Deterministic part of Puzzle1d.forward given a fixed permutation."""
    orig_shape = x.shape
    x2 = x[None, :] if x.ndim == 1 else x
    batch, length = x2.shape
    rest = length % pieces
    piece_len = (length - rest) // pieces
    l_main = length - rest
    perm = perm.astype(jnp.int32)

    main2 = x2[:, :l_main]
    itemsize = np.dtype(x2.dtype).itemsize
    tb = _pick_batch_tile(batch, piece_len, itemsize) if piece_len > 0 else None

    if piece_len == 0 or batch * l_main < _PALLAS_MIN_ELEMENTS or tb is None:
        # Tiny / degenerate inputs: XLA's fused gather beats pallas_call launch
        # + per-step overhead on every TPU generation.
        permuted2 = main2.reshape(batch, pieces, piece_len)[:, perm] \
                         .reshape(batch, l_main)
    elif piece_len % 128 == 0:
        # Lane-aligned pieces: straight 2-D streaming copy, no transposes.
        permuted2 = _puzzle_pallas_lanes(main2, perm, pieces, piece_len, tb)
    else:
        # Unaligned piece_len: piece-major layout so each copied tile is a
        # dense (TB sublane x piece_len lane) block.
        main_pm = main2.reshape(batch, pieces, piece_len).transpose(1, 0, 2)
        out_pm = _puzzle_pallas_piece_major(main_pm, perm, pieces, piece_len, tb)
        permuted2 = out_pm.transpose(1, 0, 2).reshape(batch, l_main)

    if rest != 0:
        out2 = jnp.concatenate([permuted2, x2[:, l_main:]], axis=1)
    else:
        out2 = permuted2
    return out2.reshape(orig_shape)


def puzzle1d_forward(x, key, probability=1.0, pieces=3):
    """JAX/Pallas equivalent of Puzzle1d(probability, pieces).forward(x)."""
    # TODO(synk): torch.rand / torch.randperm are host-side RNG in the module;
    # reproduced with jax.random in the wrapper, not in-kernel.
    key_p, key_perm = jax.random.split(key)
    perm = jax.random.permutation(key_perm, pieces).astype(jnp.int32)
    if probability >= 1.0:          # static shortcut: always applied
        return _puzzle_apply(x, perm, pieces)
    if probability <= 0.0:          # static shortcut: never applied
        return x
    apply_flag = jax.random.uniform(key_p, ()) < probability
    # lax.cond gate: skips the whole HBM read/write when not applied.
    return lax.cond(apply_flag,
                    lambda op: _puzzle_apply(op, perm, pieces),
                    lambda op: op,
                    x)


def _reference(x, perm, pieces):
    """Pure-JAX reference of the deterministic forward (for verification)."""
    orig_shape = x.shape
    x2 = x[None, :] if x.ndim == 1 else x
    batch, length = x2.shape
    rest = length % pieces
    piece_len = (length - rest) // pieces
    main = x2[:, :length - rest] if rest != 0 else x2
    m3 = main.reshape(batch, pieces, piece_len)[:, perm]
    if rest != 0:
        out = jnp.concatenate([m3.reshape(batch, -1), x2[:, length - rest:]], axis=1)
    else:
        out = m3.reshape(batch, length)
    return out.reshape(orig_shape)


if __name__ == "__main__":
    key = jax.random.PRNGKey(0)
    k1, k2, k3, k_fwd = jax.random.split(key, 4)

    pieces = 3

    # Case A: 2-D, piece_len = 256 (multiple of 128), remainder columns present
    #          -> Pallas lane-blocked streaming-copy path.
    x_a = jax.random.normal(k1, (16, 3 * 256 + 5), dtype=jnp.float32)

    # Case B: 2-D, piece_len = 160 (NOT a multiple of 128), no remainder
    #          -> Pallas piece-major path.
    x_b = jax.random.normal(k2, (16, 3 * 160), dtype=jnp.float32)

    # Case C: tiny 1-D input -> pure-JAX fallback path.
    x_c = jax.random.normal(k3, (12,), dtype=jnp.float32)

    # Reference permutation: replicate the wrapper's key split.
    _, k_perm = jax.random.split(k_fwd)
    perm = jax.random.permutation(k_perm, pieces).astype(jnp.int32)

    for x in (x_a, x_b, x_c):
        out = jax.block_until_ready(
            puzzle1d_forward(x, k_fwd, probability=1.0, pieces=pieces))
        ref = _reference(x, perm, pieces)
        assert out.shape == x.shape and out.dtype == x.dtype
        np.testing.assert_array_equal(np.asarray(out), np.asarray(ref))

    # probability == 0 -> identity (static shortcut).
    out_id = jax.block_until_ready(
        puzzle1d_forward(x_a, k_fwd, probability=0.0, pieces=pieces))
    np.testing.assert_array_equal(np.asarray(out_id), np.asarray(x_a))

    # 0 < probability < 1 -> traced lax.cond gate; result must be either the
    # identity or the puzzled reference.
    out_p = jax.block_until_ready(
        puzzle1d_forward(x_b, k_fwd, probability=0.5, pieces=pieces))
    ref_b = _reference(x_b, perm, pieces)
    assert (np.array_equal(np.asarray(out_p), np.asarray(x_b))
            or np.array_equal(np.asarray(out_p), np.asarray(ref_b)))

    print("KERNEL_OK")
</pallas_src>

<mosaic_0001>
module attributes {stable_mosaic.version = 11 : i64} {
  func.func @_copy_kernel(%arg0: i32, %arg1: i32, %arg2: memref<3xi32, #tpu.memory_space<smem>>, %arg3: memref<1x16x257xf32, #tpu.memory_space<vmem>>, %arg4: memref<1x16x257xf32, #tpu.memory_space<vmem>>) attributes {dimension_semantics = [#tpu.dimension_semantics<parallel>, #tpu.dimension_semantics<parallel>], iteration_bounds = array<i64: 3, 1>, scalar_prefetch = 1 : i64, scratch_operands = 0 : i64, tpu.core_type = #tpu.core_type<tc>, window_params = [{transform_indices = @transform_0, window_bounds = array<i64: 1, 16, 257>}, {transform_indices = @transform_1, window_bounds = array<i64: 1, 16, 257>}]} {
    %c0 = arith.constant 0 : index
    %c0_0 = arith.constant 0 : index
    %c0_1 = arith.constant 0 : index
    %0 = vector.load %arg3[%c0, %c0_0, %c0_1] : memref<1x16x257xf32, #tpu.memory_space<vmem>>, vector<1x16x257xf32>
    %c0_2 = arith.constant 0 : index
    %c0_3 = arith.constant 0 : index
    %c0_4 = arith.constant 0 : index
    %1 = vector.load %arg4[%c0_2, %c0_3, %c0_4] : memref<1x16x257xf32, #tpu.memory_space<vmem>>, vector<1x16x257xf32>
    tpu.vector_store %arg4[%c0_2, %c0_3, %c0_4], %0 {strides = array<i32>} : memref<1x16x257xf32, #tpu.memory_space<vmem>>, vector<1x16x257xf32>,
    return
  }
  func.func @transform_0(%arg0: i32, %arg1: i32, %arg2: memref<3xi32, #tpu.memory_space<smem>>) -> (i32, i32, i32) {
    %0 = arith.index_cast %arg0 : i32 to index
    %1 = memref.load %arg2[%0] : memref<3xi32, #tpu.memory_space<smem>>
    %c0_i32 = arith.constant 0 : i32
    %c0_i32_0 = arith.constant 0 : i32
    return %1, %arg1, %c0_i32 : i32, i32, i32
  }
  func.func @transform_1(%arg0: i32, %arg1: i32, %arg2: memref<3xi32, #tpu.memory_space<smem>>) -> (i32, i32, i32) {
    %c0_i32 = arith.constant 0 : i32
    %c0_i32_0 = arith.constant 0 : i32
    return %arg0, %arg1, %c0_i32 : i32, i32, i32
  }
}

</mosaic_0001>

<llo_original>
// kernel: tpu_custom_call.1
$region0: #{tpu_custom_call.1}
  #allocation0 [shape = 'u32[]', space=smem, size = 0x4, offset = 0x4, fixed_abs, tag = 'smem constant byte address 0x4 - core index']
  #allocation1 [shape = 'u32[144,128]{1,0:T(1,128)}', space=vmem, size = 0x12000, scoped, tag = 'internal scratch']
  #allocation2 [shape = 's32[1]{0}', space=sflag, size = 0x4, scoped, tag = 'scoped memory for tpu_custom_call.1']
  #allocation3 [shape = 'u8[512]{0}', space=smem, size = 0x200, scoped, tag = 'prefetched SMEM operand 0']
  %s0 = inlined_call_operand.hbm [shape: s32[3], index: 0, kind: input, shape index: {}]
  %s1 = inlined_call_operand.hbm [shape: f32[3,16,257], index: 1, kind: input, shape index: {}]
  %s2 = inlined_call_operand.hbm [shape: f32[3,16,257], index: 2, kind: output, shape index: {}]
  %s3 = sld [smem:[#allocation0]]
  $region41: #{tpu_custom_call.1} parent=0
    _
  %s5 = ssub.s32 1, %s3
  %s6 = scalar_select 0, %s5, %s3
  %8 = dma.hbm_to_smem %s0, 16, [#allocation3], [#allocation2]
  %9 = dma.done [#allocation2], 16
  %10 = sfence
  $region1: #{tpu_custom_call.1} parent=0
    #allocation4 [shape = 'u8[49152]{0}', space=vmem, size = 0xc000, scoped, tag = 'input window, operand 1']
    #allocation5 [shape = 's32[2]{0}', space=sflag, size = 0x8, scoped, tag = 'scoped memory for tpu_custom_call.1']
    #allocation6 [shape = 's32[2]{0}', space=sflag, size = 0x8, scoped, tag = 'scoped memory for tpu_custom_call.1']
    #allocation7 [shape = 'u8[49152]{0}', space=vmem, size = 0xc000, scoped, tag = 'output window, operand 0']
    %11 = vsyncpa [#allocation5], 0
    %s12 = scalar_lea.sflag [#allocation5], 1
    %13 = vsyncpa %s12, 0
    %14 = vsyncpa [#allocation6], 0
    %s15 = scalar_lea.sflag [#allocation6], 1
    %16 = vsyncpa %s15, 0
    loop: start=0, step=1, limit=5
    $region2: #{tpu_custom_call.1} parent=1 // loop_pre_header
      _
    $region3: #{tpu_custom_call.1} parent=1 // loop_header
      %s18 = sphi 0, %s22
      %p19 = scmp.ge.s32.totalorder %s18, 5
      %s25 = sphi 0, %s37
      %s26 = sphi 0, %s33
      %s27 = sphi 0, %s25
      %s28 = sphi 0, %s26
      %s29 = sphi 0, %s27
      %s30 = sphi 0, %s28
      %s44 = sphi 0, %s46
      %s47 = sphi 0, %s44
      %s48 = sphi 0, %s47
      %s64 = sphi 0, %s48
      %s72 = sphi 0, %s74
      %s75 = sphi 0, %s72
      %s76 = sphi 0, %s75
      %s92 = sphi 0, %s76
    $region4: #{tpu_custom_call.1} parent=1 // loop_header_branch
      %21 = sbr.rel (%p19) target = $region8
    $region5: #{tpu_custom_call.1} parent=1 // loop_body
      %s23 = ssub.s32 %s18, 1
      %s24 = ssub.s32 %s18, 2
      %s31 = sadd.s32 1, %s26
      %p32 = scmp.ge.s32.totalorder %s31, 1
      %s33 = scalar_select %p32, 0, %s31
      %s34 = sadd.s32 1, %s25
      %s35 = scalar_select %p32, %s34, %s25
      %p36 = scmp.ge.s32.totalorder %s35, 3
      %s37 = scalar_select %p36, 0, %s35
      %s38 = sld [smem:[#allocation3 + %s25]]
      %s39 = sld [smem:[#allocation3 + %s37]]
      %s40 = ssub.s32 %s38, %s39
      %s41 = ssub.s32 %s26, %s33
      %s42 = sor.u32 %s40, %s41
      %p43 = scmp.eq.s32.totalorder %s42, 0
      %s45 = sadd.s32 %s44, 1
      %s46 = scalar_select %p43, %s44, %s45
      %p49 = pneg %p43
      %p50 = scmp.eq.s32.totalorder %s18, 2
      %p51 = por %p49, %p50
      %p52 = scmp.ne.s32.totalorder %s44, %s47
      %p53 = scmp.eq.s32.totalorder %s18, 0
      %p54 = por %p52, %p53
      %p55 = scmp.ne.s32.totalorder %s44, %s47
      %p56 = scmp.eq.s32.totalorder %s23, 2
      %p57 = por %p55, %p56
      %p58 = scmp.ne.s32.totalorder %s47, %s48
      %p59 = scmp.eq.s32.totalorder %s23, 0
      %p60 = por %p58, %p59
      %p61 = scmp.ne.s32.totalorder %s47, %s48
      %p62 = scmp.eq.s32.totalorder %s24, 2
      %p63 = por %p61, %p62
      %p65 = scmp.ne.s32.totalorder %s48, %s64
      %p66 = scmp.eq.s32.totalorder %s24, 0
      %p67 = por %p65, %p66
      %s68 = ssub.s32 %s25, %s37
      %s69 = ssub.s32 %s26, %s33
      %s70 = sor.u32 %s68, %s69
      %p71 = scmp.eq.s32.totalorder %s70, 0
      %s73 = sadd.s32 %s72, 1
      %s74 = scalar_select %p71, %s72, %s73
      %p77 = pneg %p71
      %p78 = scmp.eq.s32.totalorder %s18, 2
      %p79 = por %p77, %p78
      %p80 = scmp.ne.s32.totalorder %s72, %s75
      %p81 = scmp.eq.s32.totalorder %s18, 0
      %p82 = por %p80, %p81
      %p83 = scmp.ne.s32.totalorder %s72, %s75
      %p84 = scmp.eq.s32.totalorder %s23, 2
      %p85 = por %p83, %p84
      %p86 = scmp.ne.s32.totalorder %s75, %s76
      %p87 = scmp.eq.s32.totalorder %s23, 0
      %p88 = por %p86, %p87
      %p89 = scmp.ne.s32.totalorder %s75, %s76
      %p90 = scmp.eq.s32.totalorder %s24, 2
      %p91 = por %p89, %p90
      %p93 = scmp.ne.s32.totalorder %s76, %s92
      %p94 = scmp.eq.s32.totalorder %s24, 0
      %p95 = por %p93, %p94
      %p96 = scmp.le.s32.totalorder 1, %s18
      %p97 = scmp.lt.s32.totalorder %s18, 4
      %p98 = pnand %p96, %p97
      %p99 = pneg %p98
      // Predicated region
      $region9: #{tpu_custom_call.1} parent=5 // pred_check
        _
      $region10: #{tpu_custom_call.1} parent=5 // pred_check_branch
        %101 = sbr.rel (%p98) target = $region12
      $region11: #{tpu_custom_call.1} parent=5 // pred_region
        %s102 = ssub.s32 %s18, 1
      $region12: #{tpu_custom_call.1} parent=5 // pred_fallthru
        _
      %p103 = scmp.lt.s32.totalorder %s18, 3
      // Predicated region
      $region13: #{tpu_custom_call.1} parent=5 // pred_check
        %p104 = pneg %p103
      $region14: #{tpu_custom_call.1} parent=5 // pred_check_branch
        %106 = sbr.rel (%p104) target = $region16
      $region15: #{tpu_custom_call.1} parent=5 // pred_region
        // Predicated region
        $region17: #{tpu_custom_call.1} parent=15 // pred_check
          %p107 = pneg %p54
        $region18: #{tpu_custom_call.1} parent=15 // pred_check_branch
          %109 = sbr.rel (%p107) target = $region20
        $region19: #{tpu_custom_call.1} parent=15 // pred_region
          %s110 = sand.u32 %s44, 1
          %s111 = scalar_lea.sflag [#allocation5], %s110
          %s112 = sand.u32 %s44, 1
          %s113 = smul.addr %s112, 48
          %s114 = scalar_lea.vmem [#allocation4], %s113
          %s115 = sld [smem:[#allocation3 + %s25]]
          %s116 = smul.u32 2, %s26
          %s118 = ssub.s32 768, 768
          %119 = vsyncadd %s111, %s118
          %s120 = smul.addr %s116, 3
          %s121 = smul.addr %s115, 6
          %s122 = sadd.s32 %s120, %s121
          %s123 = smul.addr %s122, 128
          %s124 = scalar_lea.hbm %s1, %s123
          %s125 = sshll.u32 %s114, 4
          %s126 = int_to_ptr.vmem [resolvable:$true] %s125
          %131 = dma.hbm_to_vmem [thread:$0]  %s124, 768, %s126, %s111, 384, 384, 24
        $region20: #{tpu_custom_call.1} parent=15 // pred_fallthru
          _
      $region16: #{tpu_custom_call.1} parent=5 // pred_fallthru
        _
      %p132 = scmp.le.s32.totalorder 1, %s18
      %p133 = scmp.lt.s32.totalorder %s18, 4
      %p134 = pnand %p132, %p133
      %p135 = pneg %p134
      // Predicated region
      $region21: #{tpu_custom_call.1} parent=5 // pred_check
        _
      $region22: #{tpu_custom_call.1} parent=5 // pred_check_branch
        %137 = sbr.rel (%p134) target = $region24
      $region23: #{tpu_custom_call.1} parent=5 // pred_region
        %s138 = ssub.s32 %s18, 1
        %s139 = sand.u32 %s47, 1
        %s140 = scalar_lea.sflag [#allocation5], %s139
        %s141 = sand.u32 %s47, 1
        %s142 = smul.addr %s141, 48
        %s143 = scalar_lea.vmem [#allocation4], %s142
        // Predicated region
        $region25: #{tpu_custom_call.1} parent=23 // pred_check
          %p144 = pneg %p60
        $region26: #{tpu_custom_call.1} parent=23 // pred_check_branch
          %146 = sbr.rel (%p144) target = $region28
        $region27: #{tpu_custom_call.1} parent=23 // pred_region
          %147 = dma.done %s140, 768
        $region28: #{tpu_custom_call.1} parent=23 // pred_fallthru
          _
        %s148 = sand.u32 %s47, 1
        %s149 = scalar_lea.sflag [#allocation5], %s148
        %s150 = sand.u32 %s47, 1
        %s151 = smul.addr %s150, 48
        %s152 = scalar_lea.vmem [#allocation4], %s151
        %p153 = pneg %p60
        %p154 = pneg %p57
        %p155 = pneg %p88
        %p156 = pneg %p85
        %s157 = sand.u32 %s75, 1
        %s158 = scalar_lea.sflag [#allocation6], %s157
        %s159 = sand.u32 %s75, 1
        %s160 = smul.addr %s159, 48
        %s161 = scalar_lea.vmem [#allocation7], %s160
        %s162 = sld [smem:[#allocation3 + %s27]]
        %s163 = smul.u32 2, %s28
        %s164 = smul.u32 2, %s28
        %v165 = vld [vmem:[%s143] sm:$0xff]
        %v166 = vld [vmem:[%s143 + $0x8] sm:$0xff]
        %v167 = vld [vmem:[%s143 + $0x10] sm:$0xff]
        %v168 = vld [vmem:[%s143 + $0x18] sm:$0xff]
        %v169 = vld [vmem:[%s143 + $0x20] sm:$0xff]
        %v170 = vld [vmem:[%s143 + $0x28] sm:$0xff]
        %171 = vst [vmem:[%s161] sm:$0xff] %v165
        %172 = vst [vmem:[%s161 + $0x8] sm:$0xff] %v166
        %vm173 = vcmask 7168
        %174 = vst.msk [vmem:[%s161 + $0x10] sm:$0xff] %vm173, %v167
        %175 = vst [vmem:[%s161 + $0x18] sm:$0xff] %v168
        %176 = vst [vmem:[%s161 + $0x20] sm:$0xff] %v169
        %177 = vst.msk [vmem:[%s161 + $0x28] sm:$0xff] %vm173, %v170
        %s178 = sand.u32 %s75, 1
        %s179 = scalar_lea.sflag [#allocation6], %s178
        %s180 = sand.u32 %s75, 1
        %s181 = smul.addr %s180, 48
        %s182 = scalar_lea.vmem [#allocation7], %s181
        // Predicated region
        $region29: #{tpu_custom_call.1} parent=23 // pred_check
          %p183 = pneg %p85
        $region30: #{tpu_custom_call.1} parent=23 // pred_check_branch
          %185 = sbr.rel (%p183) target = $region32
        $region31: #{tpu_custom_call.1} parent=23 // pred_region
          %s186 = smul.u32 2, %s28
          %s188 = ssub.s32 768, 768
          %189 = vsyncadd %s179, %s188
          %s190 = smul.addr %s186, 3
          %s191 = smul.addr %s27, 6
          %s192 = sadd.s32 %s190, %s191
          %s193 = smul.addr %s192, 128
          %s194 = scalar_lea.hbm %s2, %s193
          %s195 = sshll.u32 %s182, 4
          %s196 = int_to_ptr.vmem [resolvable:$true] %s195
          %201 = dma.vmem_to_hbm [thread:$0]  %s196, 768, %s194, %s179, 384, 384, 24
        $region32: #{tpu_custom_call.1} parent=23 // pred_fallthru
          _
      $region24: #{tpu_custom_call.1} parent=5 // pred_fallthru
        _
      %p202 = scmp.le.s32.totalorder 2, %s18
      // Predicated region
      $region33: #{tpu_custom_call.1} parent=5 // pred_check
        %p203 = pneg %p202
      $region34: #{tpu_custom_call.1} parent=5 // pred_check_branch
        %205 = sbr.rel (%p203) target = $region36
      $region35: #{tpu_custom_call.1} parent=5 // pred_region
        %s206 = ssub.s32 %s18, 2
        // Predicated region
        $region37: #{tpu_custom_call.1} parent=35 // pred_check
          %p207 = pneg %p91
        $region38: #{tpu_custom_call.1} parent=35 // pred_check_branch
          %209 = sbr.rel (%p207) target = $region40
        $region39: #{tpu_custom_call.1} parent=35 // pred_region
          %s210 = sand.u32 %s76, 1
          %s211 = scalar_lea.sflag [#allocation6], %s210
          %s212 = sand.u32 %s76, 1
          %s213 = smul.addr %s212, 48
          %s214 = scalar_lea.vmem [#allocation7], %s213
          %215 = dma.done %s211, 768
        $region40: #{tpu_custom_call.1} parent=35 // pred_fallthru
          _
      $region36: #{tpu_custom_call.1} parent=5 // pred_fallthru
        _
    $region6: #{tpu_custom_call.1} parent=1 // loop_footer
      %s22 = sadd.s32 1, %s18
    $region7: #{tpu_custom_call.1} parent=1 // loop_footer_branch
      %17 = sbr.rel target = $region3
    $region8: #{tpu_custom_call.1} parent=1 // loop_exit
      _
    %216 = vsyncpa [#allocation5], 1
    %s217 = scalar_lea.sflag [#allocation5], 1
    %218 = vsyncpa %s217, 1
    %219 = vsyncpa [#allocation6], 1
    %s220 = scalar_lea.sflag [#allocation6], 1
    %221 = vsyncpa %s220, 1

</llo_original>
